<compile_context>
chip_gen: v7x
topology: tpu7x:2x2x1
jax: 0.10.0
libtpu: 0.0.40
codegen_flags: <defaults>
</compile_context>

<pallas_src>
import functools

import jax
import jax.numpy as jnp
from jax.experimental import pallas as pl
from jax.experimental.pallas import tpu as pltpu

GROUP = 16                      # samples packed per 128-lane row (16 * 8 features)


def _cdiv(a, b):
    return -(-a // b)


def _round_up(a, m):
    return _cdiv(a, m) * m


def _tanh(x, bf16_tanh):
    if bf16_tanh:
        # v6e/v7x EUP evaluates bf16 transcendentals ~2x faster; keep the
        # surrounding muls/adds in f32.  (Do not enable on v5e.)
        return jnp.tanh(x.astype(jnp.bfloat16)).astype(jnp.float32)
    return jnp.tanh(x)


def _silu(x, bf16_tanh):
    # x * sigmoid(x) == a * tanh(a) + a  with a = x/2
    # (one fewer VPU multiply/add per element than x * 0.5*(tanh(0.5x)+1)).
    a = 0.5 * x
    return a * _tanh(a, bf16_tanh) + a


def _sigmoid(x, bf16_tanh):
    # Numerically robust logistic on the EUP (no exp overflow, no f32 divide).
    return 0.5 * _tanh(0.5 * x, bf16_tanh) + 0.5


def mlp_kernel(w1_ref, b1_ref, w2_ref, b2_ref, w3_ref, b3_ref, x_ref, o_ref,
               *, bf16_tanh=False):
    # x_ref: (tbr, 128) — each row holds 16 samples x 8 features, lane-dense.
    x = x_ref[...].astype(jnp.float32)

    # Block-diagonal weights de-interleave the 16-samples-per-row packing on
    # the MXU (zeros in the off-diagonal blocks contribute exactly nothing).
    h = jnp.dot(x, w1_ref[...], preferred_element_type=jnp.float32) + b1_ref[...]
    h = _silu(h, bf16_tanh)                                   # (tbr, 192)
    h = jnp.dot(h, w2_ref[...], preferred_element_type=jnp.float32) + b2_ref[...]
    h = _silu(h, bf16_tanh)                                   # (tbr, 128)
    y = jnp.dot(h, w3_ref[...], preferred_element_type=jnp.float32) + b3_ref[...]
    o_ref[...] = _sigmoid(y, bf16_tanh).astype(o_ref.dtype)   # (tbr, 16)


def pack_params(params):
    """Build MXU-ready block-diagonal weights from PyTorch-layout params.

    params: {"w1": (12,8), "b1": (12,), "w2": (8,12), "b2": (8,),
             "w3": (1,8),  "b3": (1,)}
    """
    f32 = lambda a: jnp.asarray(a, jnp.float32)
    w1, b1 = f32(params["w1"]), f32(params["b1"])
    w2, b2 = f32(params["w2"]), f32(params["b2"])
    w3, b3 = f32(params["w3"]), f32(params["b3"])

    eye = jnp.eye(GROUP, dtype=jnp.float32)
    w1bd = jnp.kron(eye, w1.T)            # (128, 192): block-diag of 16 x W1^T
    w2bd = jnp.kron(eye, w2.T)            # (192, 128): block-diag of 16 x W2^T
    w3bd = jnp.kron(eye, w3.T)            # (128,  16): block-diag of 16 x W3^T
    b1t = jnp.tile(b1, GROUP)[None, :]    # (1, 192)
    b2t = jnp.tile(b2, GROUP)[None, :]    # (1, 128)
    b3t = jnp.tile(b3, GROUP)[None, :]    # (1, 16)
    return (w1bd, b1t, w2bd, b2t, w3bd, b3t)


@functools.partial(jax.jit, static_argnames=("batch_tile", "bf16_tanh"))
def pima_classifier_forward(x, packed, *, batch_tile=65536, bf16_tanh=False):
    """x: (B, 8) float32/bfloat16 -> (B, 1) float32 probabilities."""
    B, F = x.shape
    assert F == 8
    assert batch_tile >= 128
    w1bd, b1t, w2bd, b2t, w3bd, b3t = packed

    # Sample-count alignment: 16 samples per lane-row; sublane granule 8 rows
    # for f32 (16 rows for bf16 because of sublane packing).
    sub_rows = 8 * max(1, 4 // x.dtype.itemsize)
    align = GROUP * sub_rows                      # 128 (f32) / 256 (bf16) samples

    # Choose grid so each step moves a multi-MiB tile, the grid has >= 2 steps
    # (v7x: both TensorCores get work), and padding waste is <= ~align*nsteps.
    bp_min = _round_up(B, align)
    nsteps = _cdiv(bp_min, batch_tile)
    if bp_min >= 2 * align:
        nsteps = max(nsteps, 2)
    tb = _round_up(_cdiv(bp_min, nsteps), align)  # samples per grid step
    Bp = nsteps * tb                              # padded batch
    tbr = tb // GROUP                             # lane-rows per grid step

    # Pad only if needed (aligned batches take the zero-copy path), then do a
    # metadata-only row-major reshape to the lane-dense (Bp/16, 128) slab.
    xp = x if Bp == B else jnp.pad(x, ((0, Bp - B), (0, 0)))
    xs = xp.reshape(Bp // GROUP, GROUP * 8)

    kernel = functools.partial(mlp_kernel, bf16_tanh=bf16_tanh)
    const = lambda i: (0, 0)                      # resident (never re-DMA'd) blocks

    ys = pl.pallas_call(
        kernel,
        out_shape=jax.ShapeDtypeStruct((Bp // GROUP, GROUP), jnp.float32),
        grid_spec=pltpu.PrefetchScalarGridSpec(
            num_scalar_prefetch=0,
            grid=(nsteps,),
            in_specs=[
                pl.BlockSpec(w1bd.shape, const),
                pl.BlockSpec(b1t.shape, const),
                pl.BlockSpec(w2bd.shape, const),
                pl.BlockSpec(b2t.shape, const),
                pl.BlockSpec(w3bd.shape, const),
                pl.BlockSpec(b3t.shape, const),
                pl.BlockSpec((tbr, GROUP * 8), lambda i: (i, 0)),
            ],
            out_specs=pl.BlockSpec((tbr, GROUP), lambda i: (i, 0)),
        ),
        compiler_params=pltpu.CompilerParams(
            # Batch axis is independent -> shards across v7x's two TensorCores.
            dimension_semantics=("parallel",),
            # Raise v5e's 16 MiB default so 64K-sample tiles fit; matches the
            # v6e/v7x defaults (leaves headroom under v7x's 64 MiB physical).
            vmem_limit_bytes=32 * 1024 * 1024,
        ),
    )(w1bd, b1t, w2bd, b2t, w3bd, b3t, xs)

    # (Bp/16, 16) -> (B, 1): metadata-only reshape, slice off padding.
    return ys.reshape(Bp, 1)[:B]


def init_params(key):
    """Deterministic init mimicking nn.Linear (uniform +-1/sqrt(fan_in)); PyTorch layout."""
    def linear(k, fan_in, fan_out):
        kw, kb = jax.random.split(k)
        bound = 1.0 / (fan_in ** 0.5)
        w = jax.random.uniform(kw, (fan_out, fan_in), jnp.float32, -bound, bound)
        b = jax.random.uniform(kb, (fan_out,), jnp.float32, -bound, bound)
        return w, b

    k1, k2, k3 = jax.random.split(key, 3)
    w1, b1 = linear(k1, 8, 12)
    w2, b2 = linear(k2, 12, 8)
    w3, b3 = linear(k3, 8, 1)
    return {"w1": w1, "b1": b1, "w2": w2, "b2": b2, "w3": w3, "b3": b3}


def reference_forward(x, p):
    h1 = jax.nn.silu(x @ p["w1"].T + p["b1"])
    h2 = jax.nn.silu(h1 @ p["w2"].T + p["b2"])
    return jax.nn.sigmoid(h2 @ p["w3"].T + p["b3"])


if __name__ == "__main__":
    key = jax.random.PRNGKey(0)
    kx, kp = jax.random.split(key)

    # Small demo batch, deliberately NOT a multiple of 128 so padding, the
    # bounded-waste tile selection, and the 2-step (multi-core) grid are all
    # exercised (B=200 -> Bp=256, grid=(2,), 128 samples / step).
    B = 200
    x = jax.random.normal(kx, (B, 8), dtype=jnp.float32)
    params = init_params(kp)
    packed = pack_params(params)

    y = pima_classifier_forward(x, packed)
    y = jax.block_until_ready(y)
    y_ref = reference_forward(x, params)
    assert y.shape == (B, 1)
    err = float(jnp.max(jnp.abs(y - y_ref)))
    # Tolerance covers the (pass-count) difference between Mosaic's and XLA's
    # default f32 MXU precision; outputs are probabilities in [0, 1].
    assert jnp.allclose(y, y_ref, atol=2e-3, rtol=2e-3), err

    # Optional bf16-tanh fast path (v6e / v7x EUP); looser tolerance expected.
    y_bf = jax.block_until_ready(
        pima_classifier_forward(x, packed, bf16_tanh=True))
    assert jnp.allclose(y_bf, y_ref, atol=3e-2, rtol=3e-2)

    print("KERNEL_OK")
</pallas_src>

<mosaic_0001>
module attributes {stable_mosaic.version = 11 : i64} {
  func.func @mlp_kernel(%arg0: i32, %arg1: memref<128x192xf32, #tpu.memory_space<vmem>>, %arg2: memref<1x192xf32, #tpu.memory_space<vmem>>, %arg3: memref<192x128xf32, #tpu.memory_space<vmem>>, %arg4: memref<1x128xf32, #tpu.memory_space<vmem>>, %arg5: memref<128x16xf32, #tpu.memory_space<vmem>>, %arg6: memref<1x16xf32, #tpu.memory_space<vmem>>, %arg7: memref<8x128xf32, #tpu.memory_space<vmem>>, %arg8: memref<8x16xf32, #tpu.memory_space<vmem>>) attributes {dimension_semantics = [#tpu.dimension_semantics<parallel>], iteration_bounds = array<i64: 2>, scalar_prefetch = 0 : i64, scratch_operands = 0 : i64, tpu.core_type = #tpu.core_type<tc>, window_params = [{pipeline_mode = #tpu.pipeline_mode<synchronous>, transform_indices = @transform_0, window_bounds = array<i64: 128, 192>}, {pipeline_mode = #tpu.pipeline_mode<synchronous>, transform_indices = @transform_1, window_bounds = array<i64: 1, 192>}, {pipeline_mode = #tpu.pipeline_mode<synchronous>, transform_indices = @transform_2, window_bounds = array<i64: 192, 128>}, {pipeline_mode = #tpu.pipeline_mode<synchronous>, transform_indices = @transform_3, window_bounds = array<i64: 1, 128>}, {pipeline_mode = #tpu.pipeline_mode<synchronous>, transform_indices = @transform_4, window_bounds = array<i64: 128, 16>}, {pipeline_mode = #tpu.pipeline_mode<synchronous>, transform_indices = @transform_5, window_bounds = array<i64: 1, 16>}, {transform_indices = @transform_6, window_bounds = array<i64: 8, 128>}, {transform_indices = @transform_7, window_bounds = array<i64: 8, 16>}]} {
    %c0 = arith.constant 0 : index
    %c0_0 = arith.constant 0 : index
    %0 = vector.load %arg7[%c0, %c0_0] : memref<8x128xf32, #tpu.memory_space<vmem>>, vector<8x128xf32>
    %c0_1 = arith.constant 0 : index
    %c0_2 = arith.constant 0 : index
    %1 = vector.load %arg1[%c0_1, %c0_2] : memref<128x192xf32, #tpu.memory_space<vmem>>, vector<128x192xf32>
    %cst = arith.constant dense<0.000000e+00> : vector<8x192xf32>
    %2 = tpu.matmul %0, %1, %cst {dimension_numbers = #tpu.dot_dimension_numbers<[1], [0], [0], [1], [0, 0, 1, 1], [], []>} : vector<8x128xf32>, vector<128x192xf32>, vector<8x192xf32> -> vector<8x192xf32>
    %c0_3 = arith.constant 0 : index
    %c0_4 = arith.constant 0 : index
    %3 = vector.load %arg2[%c0_3, %c0_4] : memref<1x192xf32, #tpu.memory_space<vmem>>, vector<1x192xf32>
    %4 = vector.broadcast %3 : vector<1x192xf32> to vector<8x192xf32>
    %5 = arith.addf %2, %4 : vector<8x192xf32>
    %cst_5 = arith.constant 5.000000e-01 : f32
    %6 = vector.broadcast %cst_5 : f32 to vector<8x192xf32>
    %7 = arith.mulf %6, %5 : vector<8x192xf32>
    %8 = math.tanh %7 : vector<8x192xf32>
    %9 = arith.mulf %7, %8 : vector<8x192xf32>
    %10 = arith.addf %9, %7 : vector<8x192xf32>
    %c0_6 = arith.constant 0 : index
    %c0_7 = arith.constant 0 : index
    %11 = vector.load %arg3[%c0_6, %c0_7] : memref<192x128xf32, #tpu.memory_space<vmem>>, vector<192x128xf32>
    %cst_8 = arith.constant dense<0.000000e+00> : vector<8x128xf32>
    %12 = tpu.matmul %10, %11, %cst_8 {dimension_numbers = #tpu.dot_dimension_numbers<[1], [0], [0], [1], [0, 0, 1, 1], [], []>} : vector<8x192xf32>, vector<192x128xf32>, vector<8x128xf32> -> vector<8x128xf32>
    %c0_9 = arith.constant 0 : index
    %c0_10 = arith.constant 0 : index
    %13 = vector.load %arg4[%c0_9, %c0_10] : memref<1x128xf32, #tpu.memory_space<vmem>>, vector<1x128xf32>
    %14 = vector.broadcast %13 : vector<1x128xf32> to vector<8x128xf32>
    %15 = arith.addf %12, %14 : vector<8x128xf32>
    %cst_11 = arith.constant 5.000000e-01 : f32
    %16 = vector.broadcast %cst_11 : f32 to vector<8x128xf32>
    %17 = arith.mulf %16, %15 : vector<8x128xf32>
    %18 = math.tanh %17 : vector<8x128xf32>
    %19 = arith.mulf %17, %18 : vector<8x128xf32>
    %20 = arith.addf %19, %17 : vector<8x128xf32>
    %c0_12 = arith.constant 0 : index
    %c0_13 = arith.constant 0 : index
    %21 = vector.load %arg5[%c0_12, %c0_13] : memref<128x16xf32, #tpu.memory_space<vmem>>, vector<128x16xf32>
    %cst_14 = arith.constant dense<0.000000e+00> : vector<8x16xf32>
    %22 = tpu.matmul %20, %21, %cst_14 {dimension_numbers = #tpu.dot_dimension_numbers<[1], [0], [0], [1], [0, 0, 1, 1], [], []>} : vector<8x128xf32>, vector<128x16xf32>, vector<8x16xf32> -> vector<8x16xf32>
    %c0_15 = arith.constant 0 : index
    %c0_16 = arith.constant 0 : index
    %23 = vector.load %arg6[%c0_15, %c0_16] : memref<1x16xf32, #tpu.memory_space<vmem>>, vector<1x16xf32>
    %24 = vector.broadcast %23 : vector<1x16xf32> to vector<8x16xf32>
    %25 = arith.addf %22, %24 : vector<8x16xf32>
    %cst_17 = arith.constant 5.000000e-01 : f32
    %26 = vector.broadcast %cst_17 : f32 to vector<8x16xf32>
    %27 = arith.mulf %26, %25 : vector<8x16xf32>
    %28 = math.tanh %27 : vector<8x16xf32>
    %cst_18 = arith.constant 5.000000e-01 : f32
    %29 = vector.broadcast %cst_18 : f32 to vector<8x16xf32>
    %30 = arith.mulf %29, %28 : vector<8x16xf32>
    %cst_19 = arith.constant 5.000000e-01 : f32
    %31 = vector.broadcast %cst_19 : f32 to vector<8x16xf32>
    %32 = arith.addf %30, %31 : vector<8x16xf32>
    %c0_20 = arith.constant 0 : index
    %c0_21 = arith.constant 0 : index
    %33 = vector.load %arg8[%c0_20, %c0_21] : memref<8x16xf32, #tpu.memory_space<vmem>>, vector<8x16xf32>
    tpu.vector_store %arg8[%c0_20, %c0_21], %32 {strides = array<i32>} : memref<8x16xf32, #tpu.memory_space<vmem>>, vector<8x16xf32>,
    return
  }
  func.func @transform_0(%arg0: i32) -> (i32, i32) {
    %c0_i32 = arith.constant 0 : i32
    %c0_i32_0 = arith.constant 0 : i32
    %c0_i32_1 = arith.constant 0 : i32
    return %c0_i32, %c0_i32_0 : i32, i32
  }
  func.func @transform_1(%arg0: i32) -> (i32, i32) {
    %c0_i32 = arith.constant 0 : i32
    %c0_i32_0 = arith.constant 0 : i32
    %c0_i32_1 = arith.constant 0 : i32
    return %c0_i32, %c0_i32_0 : i32, i32
  }
  func.func @transform_2(%arg0: i32) -> (i32, i32) {
    %c0_i32 = arith.constant 0 : i32
    %c0_i32_0 = arith.constant 0 : i32
    %c0_i32_1 = arith.constant 0 : i32
    return %c0_i32, %c0_i32_0 : i32, i32
  }
  func.func @transform_3(%arg0: i32) -> (i32, i32) {
    %c0_i32 = arith.constant 0 : i32
    %c0_i32_0 = arith.constant 0 : i32
    %c0_i32_1 = arith.constant 0 : i32
    return %c0_i32, %c0_i32_0 : i32, i32
  }
  func.func @transform_4(%arg0: i32) -> (i32, i32) {
    %c0_i32 = arith.constant 0 : i32
    %c0_i32_0 = arith.constant 0 : i32
    %c0_i32_1 = arith.constant 0 : i32
    return %c0_i32, %c0_i32_0 : i32, i32
  }
  func.func @transform_5(%arg0: i32) -> (i32, i32) {
    %c0_i32 = arith.constant 0 : i32
    %c0_i32_0 = arith.constant 0 : i32
    %c0_i32_1 = arith.constant 0 : i32
    return %c0_i32, %c0_i32_0 : i32, i32
  }
  func.func @transform_6(%arg0: i32) -> (i32, i32) {
    %c0_i32 = arith.constant 0 : i32
    %c0_i32_0 = arith.constant 0 : i32
    return %arg0, %c0_i32 : i32, i32
  }
  func.func @transform_7(%arg0: i32) -> (i32, i32) {
    %c0_i32 = arith.constant 0 : i32
    %c0_i32_0 = arith.constant 0 : i32
    return %arg0, %c0_i32 : i32, i32
  }
}

</mosaic_0001>

<llo_original>
// kernel: pima_classifier_forward.1
$region0: #{pima_classifier_forward.1}
  #allocation0 [shape = 'u32[]', space=smem, size = 0x4, offset = 0x4, fixed_abs, tag = 'smem constant byte address 0x4 - core index']
  #allocation1 [shape = 'u32[144,128]{1,0:T(1,128)}', space=vmem, size = 0x12000, scoped, tag = 'internal scratch']
  %s0 = inlined_call_operand.vmem [shape: f32[128,192], index: 0, kind: input, shape index: {}]
  %s1 = inlined_call_operand.vmem [shape: f32[1,192], index: 1, kind: input, shape index: {}]
  %s2 = inlined_call_operand.vmem [shape: f32[192,128], index: 2, kind: input, shape index: {}]
  %s3 = inlined_call_operand.vmem [shape: f32[1,128], index: 3, kind: input, shape index: {}]
  %s4 = inlined_call_operand.vmem [shape: f32[128,16], index: 4, kind: input, shape index: {}]
  %s5 = inlined_call_operand.vmem [shape: f32[1,16], index: 5, kind: input, shape index: {}]
  %s6 = inlined_call_operand.vmem [shape: f32[16,128], index: 6, kind: input, shape index: {}]
  %s7 = inlined_call_operand.vmem [shape: f32[16,16], index: 7, kind: output, shape index: {}]
  %s8 = sld [smem:[#allocation0]]
  $region61: #{pima_classifier_forward.1} parent=0
    _
  %s10 = ssub.s32 1, %s8
  %s11 = scalar_select 0, %s10, %s8
  loop: start=0, step=1, limit=4
  $region2: #{pima_classifier_forward.1} parent=0 // loop_pre_header
    _
  $region3: #{pima_classifier_forward.1} parent=0 // loop_header
    %s13 = sphi 0, %s17
    %p14 = scmp.ge.s32.totalorder %s13, 4
    %s21 = sphi 0, %s21
    %s23 = sphi 0, %s21
    %s24 = sphi 0, %s23
    %s38 = sphi 0, %s24
    %s42 = sphi 0, %s42
    %s44 = sphi 0, %s42
    %s45 = sphi 0, %s44
    %s59 = sphi 0, %s45
    %s63 = sphi 0, %s63
    %s65 = sphi 0, %s63
    %s66 = sphi 0, %s65
    %s80 = sphi 0, %s66
    %s84 = sphi 0, %s84
    %s86 = sphi 0, %s84
    %s87 = sphi 0, %s86
    %s101 = sphi 0, %s87
    %s105 = sphi 0, %s105
    %s107 = sphi 0, %s105
    %s108 = sphi 0, %s107
    %s122 = sphi 0, %s108
    %s126 = sphi 0, %s126
    %s128 = sphi 0, %s126
    %s129 = sphi 0, %s128
    %s143 = sphi 0, %s129
    %s149 = sphi 0, %s151
    %s152 = sphi 0, %s149
    %s153 = sphi 0, %s152
    %s169 = sphi 0, %s153
    %s175 = sphi 0, %s177
    %s178 = sphi 0, %s175
    %s179 = sphi 0, %s178
    %s195 = sphi 0, %s179
  $region4: #{pima_classifier_forward.1} parent=0 // loop_header_branch
    %16 = sbr.rel (%p14) target = $region8
  $region5: #{pima_classifier_forward.1} parent=0 // loop_body
    %s18 = ssub.s32 %s13, 1
    %s19 = ssub.s32 %s13, 2
    %s20 = sadd.s32 %s13, 1
    %s22 = sadd.s32 %s21, 1
    %p25 = scmp.eq.s32.totalorder %s13, 1
    %p26 = scmp.ne.s32.totalorder %s21, %s23
    %p27 = scmp.eq.s32.totalorder %s13, 0
    %p28 = por %p26, %p27
    %p29 = scmp.ne.s32.totalorder %s21, %s23
    %p30 = scmp.eq.s32.totalorder %s18, 1
    %p31 = por %p29, %p30
    %p32 = scmp.ne.s32.totalorder %s23, %s24
    %p33 = scmp.eq.s32.totalorder %s18, 0
    %p34 = por %p32, %p33
    %p35 = scmp.ne.s32.totalorder %s23, %s24
    %p36 = scmp.eq.s32.totalorder %s19, 1
    %p37 = por %p35, %p36
    %p39 = scmp.ne.s32.totalorder %s24, %s38
    %p40 = scmp.eq.s32.totalorder %s19, 0
    %p41 = por %p39, %p40
    %s43 = sadd.s32 %s42, 1
    %p46 = scmp.eq.s32.totalorder %s13, 1
    %p47 = scmp.ne.s32.totalorder %s42, %s44
    %p48 = scmp.eq.s32.totalorder %s13, 0
    %p49 = por %p47, %p48
    %p50 = scmp.ne.s32.totalorder %s42, %s44
    %p51 = scmp.eq.s32.totalorder %s18, 1
    %p52 = por %p50, %p51
    %p53 = scmp.ne.s32.totalorder %s44, %s45
    %p54 = scmp.eq.s32.totalorder %s18, 0
    %p55 = por %p53, %p54
    %p56 = scmp.ne.s32.totalorder %s44, %s45
    %p57 = scmp.eq.s32.totalorder %s19, 1
    %p58 = por %p56, %p57
    %p60 = scmp.ne.s32.totalorder %s45, %s59
    %p61 = scmp.eq.s32.totalorder %s19, 0
    %p62 = por %p60, %p61
    %s64 = sadd.s32 %s63, 1
    %p67 = scmp.eq.s32.totalorder %s13, 1
    %p68 = scmp.ne.s32.totalorder %s63, %s65
    %p69 = scmp.eq.s32.totalorder %s13, 0
    %p70 = por %p68, %p69
    %p71 = scmp.ne.s32.totalorder %s63, %s65
    %p72 = scmp.eq.s32.totalorder %s18, 1
    %p73 = por %p71, %p72
    %p74 = scmp.ne.s32.totalorder %s65, %s66
    %p75 = scmp.eq.s32.totalorder %s18, 0
    %p76 = por %p74, %p75
    %p77 = scmp.ne.s32.totalorder %s65, %s66
    %p78 = scmp.eq.s32.totalorder %s19, 1
    %p79 = por %p77, %p78
    %p81 = scmp.ne.s32.totalorder %s66, %s80
    %p82 = scmp.eq.s32.totalorder %s19, 0
    %p83 = por %p81, %p82
    %s85 = sadd.s32 %s84, 1
    %p88 = scmp.eq.s32.totalorder %s13, 1
    %p89 = scmp.ne.s32.totalorder %s84, %s86
    %p90 = scmp.eq.s32.totalorder %s13, 0
    %p91 = por %p89, %p90
    %p92 = scmp.ne.s32.totalorder %s84, %s86
    %p93 = scmp.eq.s32.totalorder %s18, 1
    %p94 = por %p92, %p93
    %p95 = scmp.ne.s32.totalorder %s86, %s87
    %p96 = scmp.eq.s32.totalorder %s18, 0
    %p97 = por %p95, %p96
    %p98 = scmp.ne.s32.totalorder %s86, %s87
    %p99 = scmp.eq.s32.totalorder %s19, 1
    %p100 = por %p98, %p99
    %p102 = scmp.ne.s32.totalorder %s87, %s101
    %p103 = scmp.eq.s32.totalorder %s19, 0
    %p104 = por %p102, %p103
    %s106 = sadd.s32 %s105, 1
    %p109 = scmp.eq.s32.totalorder %s13, 1
    %p110 = scmp.ne.s32.totalorder %s105, %s107
    %p111 = scmp.eq.s32.totalorder %s13, 0
    %p112 = por %p110, %p111
    %p113 = scmp.ne.s32.totalorder %s105, %s107
    %p114 = scmp.eq.s32.totalorder %s18, 1
    %p115 = por %p113, %p114
    %p116 = scmp.ne.s32.totalorder %s107, %s108
    %p117 = scmp.eq.s32.totalorder %s18, 0
    %p118 = por %p116, %p117
    %p119 = scmp.ne.s32.totalorder %s107, %s108
    %p120 = scmp.eq.s32.totalorder %s19, 1
    %p121 = por %p119, %p120
    %p123 = scmp.ne.s32.totalorder %s108, %s122
    %p124 = scmp.eq.s32.totalorder %s19, 0
    %p125 = por %p123, %p124
    %s127 = sadd.s32 %s126, 1
    %p130 = scmp.eq.s32.totalorder %s13, 1
    %p131 = scmp.ne.s32.totalorder %s126, %s128
    %p132 = scmp.eq.s32.totalorder %s13, 0
    %p133 = por %p131, %p132
    %p134 = scmp.ne.s32.totalorder %s126, %s128
    %p135 = scmp.eq.s32.totalorder %s18, 1
    %p136 = por %p134, %p135
    %p137 = scmp.ne.s32.totalorder %s128, %s129
    %p138 = scmp.eq.s32.totalorder %s18, 0
    %p139 = por %p137, %p138
    %p140 = scmp.ne.s32.totalorder %s128, %s129
    %p141 = scmp.eq.s32.totalorder %s19, 1
    %p142 = por %p140, %p141
    %p144 = scmp.ne.s32.totalorder %s129, %s143
    %p145 = scmp.eq.s32.totalorder %s19, 0
    %p146 = por %p144, %p145
    %s147 = ssub.s32 %s13, %s20
    %p148 = scmp.eq.s32.totalorder %s147, 0
    %s150 = sadd.s32 %s149, 1
    %s151 = scalar_select %p148, %s149, %s150
    %p154 = pneg %p148
    %p155 = scmp.eq.s32.totalorder %s13, 1
    %p156 = por %p154, %p155
    %p157 = scmp.ne.s32.totalorder %s149, %s152
    %p158 = scmp.eq.s32.totalorder %s13, 0
    %p159 = por %p157, %p158
    %p160 = scmp.ne.s32.totalorder %s149, %s152
    %p161 = scmp.eq.s32.totalorder %s18, 1
    %p162 = por %p160, %p161
    %p163 = scmp.ne.s32.totalorder %s152, %s153
    %p164 = scmp.eq.s32.totalorder %s18, 0
    %p165 = por %p163, %p164
    %p166 = scmp.ne.s32.totalorder %s152, %s153
    %p167 = scmp.eq.s32.totalorder %s19, 1
    %p168 = por %p166, %p167
    %p170 = scmp.ne.s32.totalorder %s153, %s169
    %p171 = scmp.eq.s32.totalorder %s19, 0
    %p172 = por %p170, %p171
    %s173 = ssub.s32 %s13, %s20
    %p174 = scmp.eq.s32.totalorder %s173, 0
    %s176 = sadd.s32 %s175, 1
    %s177 = scalar_select %p174, %s175, %s176
    %p180 = pneg %p174
    %p181 = scmp.eq.s32.totalorder %s13, 1
    %p182 = por %p180, %p181
    %p183 = scmp.ne.s32.totalorder %s175, %s178
    %p184 = scmp.eq.s32.totalorder %s13, 0
    %p185 = por %p183, %p184
    %p186 = scmp.ne.s32.totalorder %s175, %s178
    %p187 = scmp.eq.s32.totalorder %s18, 1
    %p188 = por %p186, %p187
    %p189 = scmp.ne.s32.totalorder %s178, %s179
    %p190 = scmp.eq.s32.totalorder %s18, 0
    %p191 = por %p189, %p190
    %p192 = scmp.ne.s32.totalorder %s178, %s179
    %p193 = scmp.eq.s32.totalorder %s19, 1
    %p194 = por %p192, %p193
    %p196 = scmp.ne.s32.totalorder %s179, %s195
    %p197 = scmp.eq.s32.totalorder %s19, 0
    %p198 = por %p196, %p197
    %p199 = scmp.le.s32.totalorder 1, %s13
    %p200 = scmp.lt.s32.totalorder %s13, 3
    %p201 = pnand %p199, %p200
    %p202 = pneg %p201
    // Predicated region
    $region9: #{pima_classifier_forward.1} parent=5 // pred_check
      _
    $region10: #{pima_classifier_forward.1} parent=5 // pred_check_branch
      %204 = sbr.rel (%p201) target = $region12
    $region11: #{pima_classifier_forward.1} parent=5 // pred_region
      %s205 = ssub.s32 %s13, 1
      // Predicated region
      $region13: #{pima_classifier_forward.1} parent=11 // pred_check
        %p206 = pneg %p34
      $region14: #{pima_classifier_forward.1} parent=11 // pred_check_branch
        %208 = sbr.rel (%p206) target = $region16
      $region15: #{pima_classifier_forward.1} parent=11 // pred_region
        _
      $region16: #{pima_classifier_forward.1} parent=11 // pred_fallthru
        _
      // Predicated region
      $region17: #{pima_classifier_forward.1} parent=11 // pred_check
        %p209 = pneg %p55
      $region18: #{pima_classifier_forward.1} parent=11 // pred_check_branch
        %211 = sbr.rel (%p209) target = $region20
      $region19: #{pima_classifier_forward.1} parent=11 // pred_region
        _
      $region20: #{pima_classifier_forward.1} parent=11 // pred_fallthru
        _
      // Predicated region
      $region21: #{pima_classifier_forward.1} parent=11 // pred_check
        %p212 = pneg %p76
      $region22: #{pima_classifier_forward.1} parent=11 // pred_check_branch
        %214 = sbr.rel (%p212) target = $region24
      $region23: #{pima_classifier_forward.1} parent=11 // pred_region
        _
      $region24: #{pima_classifier_forward.1} parent=11 // pred_fallthru
        _
      // Predicated region
      $region25: #{pima_classifier_forward.1} parent=11 // pred_check
        %p215 = pneg %p97
      $region26: #{pima_classifier_forward.1} parent=11 // pred_check_branch
        %217 = sbr.rel (%p215) target = $region28
      $region27: #{pima_classifier_forward.1} parent=11 // pred_region
        _
      $region28: #{pima_classifier_forward.1} parent=11 // pred_fallthru
        _
      // Predicated region
      $region29: #{pima_classifier_forward.1} parent=11 // pred_check
        %p218 = pneg %p118
      $region30: #{pima_classifier_forward.1} parent=11 // pred_check_branch
        %220 = sbr.rel (%p218) target = $region32
      $region31: #{pima_classifier_forward.1} parent=11 // pred_region
        _
      $region32: #{pima_classifier_forward.1} parent=11 // pred_fallthru
        _
      // Predicated region
      $region33: #{pima_classifier_forward.1} parent=11 // pred_check
        %p221 = pneg %p139
      $region34: #{pima_classifier_forward.1} parent=11 // pred_check_branch
        %223 = sbr.rel (%p221) target = $region36
      $region35: #{pima_classifier_forward.1} parent=11 // pred_region
        _
      $region36: #{pima_classifier_forward.1} parent=11 // pred_fallthru
        _
    $region12: #{pima_classifier_forward.1} parent=5 // pred_fallthru
      _
    %p224 = scmp.lt.s32.totalorder %s13, 2
    // Predicated region
    $region37: #{pima_classifier_forward.1} parent=5 // pred_check
      %p225 = pneg %p224
    $region38: #{pima_classifier_forward.1} parent=5 // pred_check_branch
      %227 = sbr.rel (%p225) target = $region40
    $region39: #{pima_classifier_forward.1} parent=5 // pred_region
      // Predicated region
      $region41: #{pima_classifier_forward.1} parent=39 // pred_check
        %p228 = pneg %p159
      $region42: #{pima_classifier_forward.1} parent=39 // pred_check_branch
        %230 = sbr.rel (%p228) target = $region44
      $region43: #{pima_classifier_forward.1} parent=39 // pred_region
        %p231 = scmp.lt.s32.totalorder %s13, 1
        %s232 = scalar_select %p231, %s13, 1
        %s233 = smul.addr %s232, 8
        %s234 = scalar_lea.vmem %s6, %s233
      $region44: #{pima_classifier_forward.1} parent=39 // pred_fallthru
        _
    $region40: #{pima_classifier_forward.1} parent=5 // pred_fallthru
      _
    %p235 = scmp.le.s32.totalorder 1, %s13
    %p236 = scmp.lt.s32.totalorder %s13, 3
    %p237 = pnand %p235, %p236
    %p238 = pneg %p237
    // Predicated region
    $region45: #{pima_classifier_forward.1} parent=5 // pred_check
      _
    $region46: #{pima_classifier_forward.1} parent=5 // pred_check_branch
      %240 = sbr.rel (%p237) target = $region48
    $region47: #{pima_classifier_forward.1} parent=5 // pred_region
      %s241 = ssub.s32 %s13, 1
      %p242 = pneg %p34
      %p243 = pneg %p31
      %p244 = pneg %p55
      %p245 = pneg %p52
      %p246 = pneg %p76
      %p247 = pneg %p73
      %p248 = pneg %p97
      %p249 = pneg %p94
      %p250 = pneg %p118
      %p251 = pneg %p115
      %p252 = pneg %p139
      %p253 = pneg %p136
      %p254 = scmp.lt.s32.totalorder %s18, 1
      %s255 = scalar_select %p254, %s18, 1
      %s256 = smul.addr %s255, 8
      %s257 = scalar_lea.vmem %s6, %s256
      %p258 = pneg %p165
      %p259 = pneg %p162
      %p260 = pneg %p191
      %p261 = pneg %p188
      %p262 = scmp.lt.s32.totalorder %s18, 1
      %s263 = scalar_select %p262, %s18, 1
      %s264 = smul.addr %s263, 8
      %s265 = scalar_lea.vmem %s7, %s264
      %p266 = scmp.lt.s32.totalorder %s18, 1
      %s267 = scalar_select %p266, %s18, 1
      %s268 = smul.addr %s267, 8
      %s269 = scalar_lea.vmem %s6, %s268
      %p270 = scmp.lt.s32.totalorder %s18, 1
      %s271 = scalar_select %p270, %s18, 1
      %s272 = smul.addr %s271, 8
      %s273 = scalar_lea.vmem %s7, %s272
      %v274 = vld [vmem:[%s269] sm:$0xff]
      %v275 = vld [vmem:[%s0] sm:$0xff]
      %v276 = vld [vmem:[%s0 + $0x8] sm:$0xff]
      %v277 = vld [vmem:[%s0 + $0x10] sm:$0xff]
      %v278 = vld [vmem:[%s0 + $0x18] sm:$0xff]
      %v279 = vld [vmem:[%s0 + $0x20] sm:$0xff]
      %v280 = vld [vmem:[%s0 + $0x28] sm:$0xff]
      %v281 = vld [vmem:[%s0 + $0x30] sm:$0xff]
      %v282 = vld [vmem:[%s0 + $0x38] sm:$0xff]
      %v283 = vld [vmem:[%s0 + $0x40] sm:$0xff]
      %v284 = vld [vmem:[%s0 + $0x48] sm:$0xff]
      %v285 = vld [vmem:[%s0 + $0x50] sm:$0xff]
      %v286 = vld [vmem:[%s0 + $0x58] sm:$0xff]
      %v287 = vld [vmem:[%s0 + $0x60] sm:$0xff]
      %v288 = vld [vmem:[%s0 + $0x68] sm:$0xff]
      %v289 = vld [vmem:[%s0 + $0x70] sm:$0xff]
      %v290 = vld [vmem:[%s0 + $0x78] sm:$0xff]
      %v291 = vld [vmem:[%s0 + $0x80] sm:$0xff]
      %v292 = vld [vmem:[%s0 + $0x88] sm:$0xff]
      %v293 = vld [vmem:[%s0 + $0x90] sm:$0xff]
      %v294 = vld [vmem:[%s0 + $0x98] sm:$0xff]
      %v295 = vld [vmem:[%s0 + $0xa0] sm:$0xff]
      %v296 = vld [vmem:[%s0 + $0xa8] sm:$0xff]
      %v297 = vld [vmem:[%s0 + $0xb0] sm:$0xff]
      %v298 = vld [vmem:[%s0 + $0xb8] sm:$0xff]
      %v299 = vld [vmem:[%s0 + $0xc0] sm:$0xff]
      %v300 = vld [vmem:[%s0 + $0xc8] sm:$0xff]
      %v301 = vld [vmem:[%s0 + $0xd0] sm:$0xff]
      %v302 = vld [vmem:[%s0 + $0xd8] sm:$0xff]
      %v303 = vld [vmem:[%s0 + $0xe0] sm:$0xff]
      %v304 = vld [vmem:[%s0 + $0xe8] sm:$0xff]
      %v305 = vld [vmem:[%s0 + $0xf0] sm:$0xff]
      %v306 = vld [vmem:[%s0 + $0xf8] sm:$0xff]
      %v307 = vld [vmem:[%s1] sm:$0x3]
      %v309 = vlaneseq
      %v310 = vshrl.u32 %v309, 7
      %v311 = vsub.s32 0, %v310
      %v312 = vrot.slane %v307, %v311
      %v313 = vlaneseq
      %v314 = vshrl.u32 %v313, 7
      %v315 = vsub.s32 1, %v314
      %v316 = vrot.slane %v307, %v315
      %319 = vmatprep.subr.mxu0 %v276
      %320 = vmatpush1.msra.mxu0 %v275
      %321 = vmatprep.subr.mxu0 %v278
      %322 = vmatpush1.msra.mxu0 %v277
      %323 = vmatprep.subr.mxu0 %v280
      %324 = vmatpush1.msra.mxu0 %v279
      %325 = vmatprep.subr.mxu0 %v282
      %326 = vmatpush1.msra.mxu0 %v281
      %327 = vmatprep.subr.mxu0 %v284
      %328 = vmatpush1.msra.mxu0 %v283
      %329 = vmatprep.subr.mxu0 %v286
      %330 = vmatpush1.msra.mxu0 %v285
      %331 = vmatprep.subr.mxu0 %v288
      %332 = vmatpush1.msra.mxu0 %v287
      %333 = vmatprep.subr.mxu0 %v290
      %334 = vmatpush1.msra.mxu0 %v289
      %335 = vmatprep.subr.mxu0 %v292
      %336 = vmatpush1.msra.mxu0 %v291
      %337 = vmatprep.subr.mxu0 %v294
      %338 = vmatpush1.msra.mxu0 %v293
      %339 = vmatprep.subr.mxu0 %v296
      %340 = vmatpush1.msra.mxu0 %v295
      %341 = vmatprep.subr.mxu0 %v298
      %342 = vmatpush1.msra.mxu0 %v297
      %343 = vmatprep.subr.mxu0 %v300
      %344 = vmatpush1.msra.mxu0 %v299
      %345 = vmatprep.subr.mxu0 %v302
      %346 = vmatpush1.msra.mxu0 %v301
      %347 = vmatprep.subr.mxu0 %v304
      %348 = vmatpush1.msra.mxu0 %v303
      %349 = vmatprep.subr.mxu0 %v306
      %350 = vmatpush1.msra.mxu0 %v305
      %351 = vmatprep.subr.mxu0 0.0
      %352 = vmatpush1.msra.mxu0 0.0
      %353 = vmatprep.subr.mxu0 0.0
      %354 = vmatpush1.msra.mxu0 0.0
      %355 = vmatprep.subr.mxu0 0.0
      %356 = vmatpush1.msra.mxu0 0.0
      %357 = vmatprep.subr.mxu0 0.0
      %358 = vmatpush1.msra.mxu0 0.0
      %359 = vmatprep.subr.mxu0 0.0
      %360 = vmatpush1.msra.mxu0 0.0
      %361 = vmatprep.subr.mxu0 0.0
      %362 = vmatpush1.msra.mxu0 0.0
      %363 = vmatprep.subr.mxu0 0.0
      %364 = vmatpush1.msra.mxu0 0.0
      %365 = vmatprep.subr.mxu0 0.0
      %366 = vmatpush1.msra.mxu0 0.0
      %367 = vmatprep.subr.mxu0 0.0
      %368 = vmatpush1.msra.mxu0 0.0
      %369 = vmatprep.subr.mxu0 0.0
      %370 = vmatpush1.msra.mxu0 0.0
      %371 = vmatprep.subr.mxu0 0.0
      %372 = vmatpush1.msra.mxu0 0.0
      %373 = vmatprep.subr.mxu0 0.0
      %374 = vmatpush1.msra.mxu0 0.0
      %375 = vmatprep.subr.mxu0 0.0
      %376 = vmatpush1.msra.mxu0 0.0
      %377 = vmatprep.subr.mxu0 0.0
      %378 = vmatpush1.msra.mxu0 0.0
      %379 = vmatprep.subr.mxu0 0.0
      %380 = vmatpush1.msra.mxu0 0.0
      %381 = vmatprep.subr.mxu0 0.0
      %382 = vmatpush1.msra.mxu0 0.0
      %383 = vmatprep.mubr.f32.mxu0 0.0
      %384 = vmatmul.mubr.f32.gmra.mrb[0].mxu0 %v274
      %v385 = vpop.f32.mrb[0].mxu0
      %v386 = vadd.f32 %v312, %v385
      %v387 = vpop.f32.mrb[0].mxu0
      %v388 = vadd.f32 %v316, %v387
      %389 = vdwg.mxu0
      %v390 = vmul.f32 %v386, 0.5
      %v391 = vmul.f32 %v388, 0.5
      %v392 = vtanh.pop %v390
      %v393 = vtanh.pop %v391
      %v394 = vmul.f32 %v390, %v392
      %v395 = vmul.f32 %v391, %v393
      %v396 = vadd.f32 %v394, %v390
      %v397 = vadd.f32 %v395, %v391
      %v398 = vld [vmem:[%s2] sm:$0xff]
      %v399 = vld [vmem:[%s2 + $0x8] sm:$0xff]
      %v400 = vld [vmem:[%s2 + $0x10] sm:$0xff]
      %v401 = vld [vmem:[%s2 + $0x18] sm:$0xff]
      %v402 = vld [vmem:[%s2 + $0x20] sm:$0xff]
      %v403 = vld [vmem:[%s2 + $0x28] sm:$0xff]
      %v404 = vld [vmem:[%s2 + $0x30] sm:$0xff]
      %v405 = vld [vmem:[%s2 + $0x38] sm:$0xff]
      %v406 = vld [vmem:[%s2 + $0x40] sm:$0xff]
      %v407 = vld [vmem:[%s2 + $0x48] sm:$0xff]
      %v408 = vld [vmem:[%s2 + $0x50] sm:$0xff]
      %v409 = vld [vmem:[%s2 + $0x58] sm:$0xff]
      %v410 = vld [vmem:[%s2 + $0x60] sm:$0xff]
      %v411 = vld [vmem:[%s2 + $0x68] sm:$0xff]
      %v412 = vld [vmem:[%s2 + $0x70] sm:$0xff]
      %v413 = vld [vmem:[%s2 + $0x78] sm:$0xff]
      %v414 = vld [vmem:[%s2 + $0x80] sm:$0xff]
      %v415 = vld [vmem:[%s2 + $0x88] sm:$0xff]
      %v416 = vld [vmem:[%s2 + $0x90] sm:$0xff]
      %v417 = vld [vmem:[%s2 + $0x98] sm:$0xff]
      %v418 = vld [vmem:[%s2 + $0xa0] sm:$0xff]
      %v419 = vld [vmem:[%s2 + $0xa8] sm:$0xff]
      %v420 = vld [vmem:[%s2 + $0xb0] sm:$0xff]
      %v421 = vld [vmem:[%s2 + $0xb8] sm:$0xff]
      %v422 = vld [vmem:[%s3] sm:$0x1]
      %v424 = vlaneseq
      %v425 = vshrl.u32 %v424, 7
      %v426 = vsub.s32 0, %v425
      %v427 = vrot.slane %v422, %v426
      %vm429 = vcmask 523264
      %v431 = vsel %vm429, %v397, 0
      %433 = vmatprep.subr.mxu0 0.0
      %434 = vmatpush1.msra.mxu0 %v398
      %435 = vmatprep.subr.mxu0 0.0
      %436 = vmatpush1.msra.mxu0 %v399
      %437 = vmatprep.subr.mxu0 0.0
      %438 = vmatpush1.msra.mxu0 %v400
      %439 = vmatprep.subr.mxu0 0.0
      %440 = vmatpush1.msra.mxu0 %v401
      %441 = vmatprep.subr.mxu0 0.0
      %442 = vmatpush1.msra.mxu0 %v402
      %443 = vmatprep.subr.mxu0 0.0
      %444 = vmatpush1.msra.mxu0 %v403
      %445 = vmatprep.subr.mxu0 0.0
      %446 = vmatpush1.msra.mxu0 %v404
      %447 = vmatprep.subr.mxu0 0.0
      %448 = vmatpush1.msra.mxu0 %v405
      %449 = vmatprep.subr.mxu0 0.0
      %450 = vmatpush1.msra.mxu0 %v406
      %451 = vmatprep.subr.mxu0 0.0
      %452 = vmatpush1.msra.mxu0 %v407
      %453 = vmatprep.subr.mxu0 0.0
      %454 = vmatpush1.msra.mxu0 %v408
      %455 = vmatprep.subr.mxu0 0.0
      %456 = vmatpush1.msra.mxu0 %v409
      %457 = vmatprep.subr.mxu0 0.0
      %458 = vmatpush1.msra.mxu0 %v410
      %459 = vmatprep.subr.mxu0 0.0
      %460 = vmatpush1.msra.mxu0 %v411
      %461 = vmatprep.subr.mxu0 0.0
      %462 = vmatpush1.msra.mxu0 %v412
      %463 = vmatprep.subr.mxu0 0.0
      %464 = vmatpush1.msra.mxu0 %v413
      %465 = vmatprep.subr.mxu0 0.0
      %466 = vmatpush1.msra.mxu0 %v414
      %467 = vmatprep.subr.mxu0 0.0
      %468 = vmatpush1.msra.mxu0 %v415
      %469 = vmatprep.subr.mxu0 0.0
      %470 = vmatpush1.msra.mxu0 %v416
      %471 = vmatprep.subr.mxu0 0.0
      %472 = vmatpush1.msra.mxu0 %v417
      %473 = vmatprep.subr.mxu0 0.0
      %474 = vmatpush1.msra.mxu0 %v418
      %475 = vmatprep.subr.mxu0 0.0
      %476 = vmatpush1.msra.mxu0 %v419
      %477 = vmatprep.subr.mxu0 0.0
      %478 = vmatpush1.msra.mxu0 %v420
      %479 = vmatprep.subr.mxu0 0.0
      %480 = vmatpush1.msra.mxu0 %v421
      %481 = vmatprep.subr.mxu0 0.0
      %482 = vmatpush1.msra.mxu0 0.0
      %483 = vmatprep.subr.mxu0 0.0
      %484 = vmatpush1.msra.mxu0 0.0
      %485 = vmatprep.subr.mxu0 0.0
      %486 = vmatpush1.msra.mxu0 0.0
      %487 = vmatprep.subr.mxu0 0.0
      %488 = vmatpush1.msra.mxu0 0.0
      %489 = vmatprep.subr.mxu0 0.0
      %490 = vmatpush1.msra.mxu0 0.0
      %491 = vmatprep.subr.mxu0 0.0
      %492 = vmatpush1.msra.mxu0 0.0
      %493 = vmatprep.subr.mxu0 0.0
      %494 = vmatpush1.msra.mxu0 0.0
      %495 = vmatprep.subr.mxu0 0.0
      %496 = vmatpush1.msra.mxu0 0.0
      %497 = vmatprep.mubr.f32.mxu0 %v431
      %498 = vmatmul.mubr.f32.gmra.mrb[0].mxu0 %v396
      %v499 = vpop.f32.mrb[0].mxu0
      %v500 = vadd.f32 %v427, %v499
      %v501 = vpop.f32.mrb[0].mxu0
      %502 = vdwg.mxu0
      %v503 = vmul.f32 %v500, 0.5
      %v504 = vtanh.pop %v503
      %v505 = vmul.f32 %v503, %v504
      %v506 = vadd.f32 %v505, %v503
      %v507 = vld [vmem:[%s4] sm:$0xff]
      %v508 = vld [vmem:[%s4 + $0x8] sm:$0xff]
      %v509 = vld [vmem:[%s4 + $0x10] sm:$0xff]
      %v510 = vld [vmem:[%s4 + $0x18] sm:$0xff]
      %v511 = vld [vmem:[%s4 + $0x20] sm:$0xff]
      %v512 = vld [vmem:[%s4 + $0x28] sm:$0xff]
      %v513 = vld [vmem:[%s4 + $0x30] sm:$0xff]
      %v514 = vld [vmem:[%s4 + $0x38] sm:$0xff]
      %v515 = vld [vmem:[%s4 + $0x40] sm:$0xff]
      %v516 = vld [vmem:[%s4 + $0x48] sm:$0xff]
      %v517 = vld [vmem:[%s4 + $0x50] sm:$0xff]
      %v518 = vld [vmem:[%s4 + $0x58] sm:$0xff]
      %v519 = vld [vmem:[%s4 + $0x60] sm:$0xff]
      %v520 = vld [vmem:[%s4 + $0x68] sm:$0xff]
      %v521 = vld [vmem:[%s4 + $0x70] sm:$0xff]
      %v522 = vld [vmem:[%s4 + $0x78] sm:$0xff]
      %v523 = vld [vmem:[%s5] sm:$0x1]
      %v525 = vlaneseq
      %v526 = vshrl.u32 %v525, 7
      %v527 = vsub.s32 0, %v526
      %v528 = vrot.slane %v523, %v527
      %530 = vmatprep.subr.mxu0 0.0
      %531 = vmatpush1.msra.mxu0 %v507
      %532 = vmatprep.subr.mxu0 0.0
      %533 = vmatpush1.msra.mxu0 %v508
      %534 = vmatprep.subr.mxu0 0.0
      %535 = vmatpush1.msra.mxu0 %v509
      %536 = vmatprep.subr.mxu0 0.0
      %537 = vmatpush1.msra.mxu0 %v510
      %538 = vmatprep.subr.mxu0 0.0
      %539 = vmatpush1.msra.mxu0 %v511
      %540 = vmatprep.subr.mxu0 0.0
      %541 = vmatpush1.msra.mxu0 %v512
      %542 = vmatprep.subr.mxu0 0.0
      %543 = vmatpush1.msra.mxu0 %v513
      %544 = vmatprep.subr.mxu0 0.0
      %545 = vmatpush1.msra.mxu0 %v514
      %546 = vmatprep.subr.mxu0 0.0
      %547 = vmatpush1.msra.mxu0 %v515
      %548 = vmatprep.subr.mxu0 0.0
      %549 = vmatpush1.msra.mxu0 %v516
      %550 = vmatprep.subr.mxu0 0.0
      %551 = vmatpush1.msra.mxu0 %v517
      %552 = vmatprep.subr.mxu0 0.0
      %553 = vmatpush1.msra.mxu0 %v518
      %554 = vmatprep.subr.mxu0 0.0
      %555 = vmatpush1.msra.mxu0 %v519
      %556 = vmatprep.subr.mxu0 0.0
      %557 = vmatpush1.msra.mxu0 %v520
      %558 = vmatprep.subr.mxu0 0.0
      %559 = vmatpush1.msra.mxu0 %v521
      %560 = vmatprep.subr.mxu0 0.0
      %561 = vmatpush1.msra.mxu0 %v522
      %562 = vmatprep.subr.mxu0 0.0
      %563 = vmatpush1.msra.mxu0 0.0
      %564 = vmatprep.subr.mxu0 0.0
      %565 = vmatpush1.msra.mxu0 0.0
      %566 = vmatprep.subr.mxu0 0.0
      %567 = vmatpush1.msra.mxu0 0.0
      %568 = vmatprep.subr.mxu0 0.0
      %569 = vmatpush1.msra.mxu0 0.0
      %570 = vmatprep.subr.mxu0 0.0
      %571 = vmatpush1.msra.mxu0 0.0
      %572 = vmatprep.subr.mxu0 0.0
      %573 = vmatpush1.msra.mxu0 0.0
      %574 = vmatprep.subr.mxu0 0.0
      %575 = vmatpush1.msra.mxu0 0.0
      %576 = vmatprep.subr.mxu0 0.0
      %577 = vmatpush1.msra.mxu0 0.0
      %578 = vmatprep.subr.mxu0 0.0
      %579 = vmatpush1.msra.mxu0 0.0
      %580 = vmatprep.subr.mxu0 0.0
      %581 = vmatpush1.msra.mxu0 0.0
      %582 = vmatprep.subr.mxu0 0.0
      %583 = vmatpush1.msra.mxu0 0.0
      %584 = vmatprep.subr.mxu0 0.0
      %585 = vmatpush1.msra.mxu0 0.0
      %586 = vmatprep.subr.mxu0 0.0
      %587 = vmatpush1.msra.mxu0 0.0
      %588 = vmatprep.subr.mxu0 0.0
      %589 = vmatpush1.msra.mxu0 0.0
      %590 = vmatprep.subr.mxu0 0.0
      %591 = vmatpush1.msra.mxu0 0.0
      %592 = vmatprep.subr.mxu0 0.0
      %593 = vmatpush1.msra.mxu0 0.0
      %594 = vmatprep.mubr.f32.mxu0 0.0
      %595 = vmatmul.mubr.f32.gmra.mrb[0].mxu0 %v506
      %v596 = vpop.f32.mrb[0].mxu0
      %v597 = vadd.f32 %v528, %v596
      %v598 = vpop.f32.mrb[0].mxu0
      %599 = vdwg.mxu0
      %v600 = vmul.f32 %v597, 0.5
      %v601 = vtanh.pop %v600
      %v602 = vmul.f32 %v601, 0.5
      %v603 = vadd.f32 %v602, 0.5
      %vm604 = vcmask 130048
      %605 = vst.msk [vmem:[%s273] sm:$0xff] %vm604, %v603
      %p606 = scmp.lt.s32.totalorder %s18, 1
      %s607 = scalar_select %p606, %s18, 1
      %s608 = smul.addr %s607, 8
      %s609 = scalar_lea.vmem %s7, %s608
      // Predicated region
      $region49: #{pima_classifier_forward.1} parent=47 // pred_check
        %p610 = pneg %p188
      $region50: #{pima_classifier_forward.1} parent=47 // pred_check_branch
        %612 = sbr.rel (%p610) target = $region52
      $region51: #{pima_classifier_forward.1} parent=47 // pred_region
        _
      $region52: #{pima_classifier_forward.1} parent=47 // pred_fallthru
        _
    $region48: #{pima_classifier_forward.1} parent=5 // pred_fallthru
      _
    %p613 = scmp.le.s32.totalorder 2, %s13
    // Predicated region
    $region53: #{pima_classifier_forward.1} parent=5 // pred_check
      %p614 = pneg %p613
    $region54: #{pima_classifier_forward.1} parent=5 // pred_check_branch
      %616 = sbr.rel (%p614) target = $region56
    $region55: #{pima_classifier_forward.1} parent=5 // pred_region
      %s617 = ssub.s32 %s13, 2
      // Predicated region
      $region57: #{pima_classifier_forward.1} parent=55 // pred_check
        %p618 = pneg %p194
      $region58: #{pima_classifier_forward.1} parent=55 // pred_check_branch
        %620 = sbr.rel (%p618) target = $region60
      $region59: #{pima_classifier_forward.1} parent=55 // pred_region
        %p621 = scmp.lt.s32.totalorder %s19, 1
        %s622 = scalar_select %p621, %s19, 1
        %s623 = smul.addr %s622, 8
        %s624 = scalar_lea.vmem %s7, %s623
      $region60: #{pima_classifier_forward.1} parent=55 // pred_fallthru
        _
    $region56: #{pima_classifier_forward.1} parent=5 // pred_fallthru
      _
  $region6: #{pima_classifier_forward.1} parent=0 // loop_footer
    %s17 = sadd.s32 1, %s13
  $region7: #{pima_classifier_forward.1} parent=0 // loop_footer_branch
    %12 = sbr.rel target = $region3
  $region8: #{pima_classifier_forward.1} parent=0 // loop_exit
    _

</llo_original>
